<compile_context>
chip_gen: v6e
topology: v6e:2x2x1
jax: 0.10.0
libtpu: 0.0.40
codegen_flags: <defaults>
</compile_context>

<pallas_src>
import jax
import jax.numpy as jnp
from jax.experimental import pallas as pl
from jax.experimental.pallas import tpu as pltpu

LANES = 128
SUBLANES = 8
MAX_TILE_ROWS = 8192                      # 8192 x 128 f32 = 4 MiB per input block
VMEM_LIMIT_BYTES = 32 * 1024 * 1024       # raises v5e default (16 MiB); default elsewhere


def _num_tensorcores() -> int:
    """Best-effort TensorCores-per-chip: 2 on v7x-class chips, else 1."""
    # TODO(synk): if plain "parallel" does not shard across the 2 v7x TCs,
    # switch the leading axis to pltpu.CORE_PARALLEL.
    try:
        kind = jax.devices()[0].device_kind.lower()
    except Exception:
        return 1
    return 2 if ("v7" in kind or "7x" in kind) else 1


def reg_mse_loss(reg_img: jax.Array, fix_img: jax.Array) -> jax.Array:
    """MSE(reg_img, fix_img) — equivalent of torch.nn.functional.mse_loss('mean')."""
    assert reg_img.shape == fix_img.shape, "mse_loss requires matching shapes"
    n = reg_img.size
    assert n > 0
    out_dtype = jnp.promote_types(reg_img.dtype, fix_img.dtype)

    a = reg_img.reshape(-1)
    b = fix_img.reshape(-1)

    # Dtype-aware sublane multiple (f32 -> 8, bf16/fp16 -> 16, int8/fp8 -> 32).
    def _row_mult(dt):
        return SUBLANES * max(1, 4 // dt.itemsize)

    row_mult = max(_row_mult(a.dtype), _row_mult(b.dtype))

    rows = n // LANES                                   # rows of the 128-aligned prefix
    tile_rows = min(MAX_TILE_ROWS, (rows // row_mult) * row_mult)

    if tile_rows == 0:
        # Tiny input (< row_mult*128 elements): plain jnp, a kernel buys nothing.
        d = a.astype(jnp.float32) - b.astype(jnp.float32)
        return (jnp.sum(d * d) / jnp.float32(n)).astype(out_dtype)

    n_main = rows * LANES
    # Free reshape when n is 128-aligned (common case). Otherwise the aligned
    # prefix runs through the kernel and the <128-element tail is summed in jnp.
    a_main = a if n_main == n else a[:n_main]
    b_main = b if n_main == n else b[:n_main]
    a2 = a_main.reshape(rows, LANES)
    b2 = b_main.reshape(rows, LANES)

    num_tiles = -(-rows // tile_rows)

    ncores = _num_tensorcores()
    if num_tiles < 2:
        ncores = 1                                      # never schedule a purely-masked spare tile
    steps_per_core = -(-num_tiles // ncores)
    needs_clamp = ncores * steps_per_core > num_tiles   # only possible on the 2-core split
    # Masking is only ever required on the last real tile / clamped spare tiles.
    needs_mask = (rows % tile_rows != 0) or needs_clamp

    # Accumulator sublane count = number of independent vreg add chains per step.
    acc_sub = 32 if tile_rows % 32 == 0 else (16 if tile_rows % 16 == 0 else SUBLANES)
    groups = tile_rows // acc_sub

    def in_index(c, i):
        t = c * steps_per_core + i
        if needs_clamp:
            t = jnp.minimum(t, num_tiles - 1)           # keep DMA in bounds; tile fully masked
        return (t, 0)

    def kernel(a_ref, b_ref, o_ref):
        c = pl.program_id(0)
        i = pl.program_id(1)

        @pl.when(i == 0)
        def _zero():
            o_ref[...] = jnp.zeros_like(o_ref)

        def accumulate(apply_mask):
            d = a_ref[...].astype(jnp.float32) - b_ref[...].astype(jnp.float32)
            sq = d * d
            if apply_mask:
                tile_idx = c * steps_per_core + i       # unclamped: spare tiles mask to zero
                row0 = tile_idx * tile_rows
                row_ids = jax.lax.broadcasted_iota(jnp.int32, (tile_rows, LANES), 0) + row0
                sq = jnp.where(row_ids < rows, sq, jnp.float32(0.0))
            # (groups, acc_sub, LANES): acc_sub/8 independent vreg accumulation chains.
            part = jnp.sum(sq.reshape(groups, acc_sub, LANES), axis=0)
            o_ref[...] += part.reshape(1, acc_sub, LANES)

        if needs_mask:
            tile_idx = c * steps_per_core + i

            @pl.when(tile_idx < num_tiles - 1)
            def _full_tile():
                accumulate(False)

            @pl.when(tile_idx >= num_tiles - 1)
            def _edge_tile():
                accumulate(True)
        else:
            accumulate(False)

    partials = pl.pallas_call(
        kernel,
        out_shape=jax.ShapeDtypeStruct((ncores, acc_sub, LANES), jnp.float32),
        grid_spec=pltpu.PrefetchScalarGridSpec(
            num_scalar_prefetch=0,
            grid=(ncores, steps_per_core),
            in_specs=[
                pl.BlockSpec((tile_rows, LANES), in_index),
                pl.BlockSpec((tile_rows, LANES), in_index),
            ],
            out_specs=pl.BlockSpec((1, acc_sub, LANES), lambda c, i: (c, 0, 0)),
        ),
        compiler_params=pltpu.CompilerParams(
            dimension_semantics=("parallel", "arbitrary"),
            vmem_limit_bytes=VMEM_LIMIT_BYTES,
        ),
    )(a2, b2)

    # Single final cross-lane reduce + divide outside the hot loop.
    total = jnp.sum(partials)
    if n_main != n:
        ta = a[n_main:].astype(jnp.float32)
        tb = b[n_main:].astype(jnp.float32)
        total = total + jnp.sum((ta - tb) * (ta - tb))
    return (total / jnp.float32(n)).astype(out_dtype)


class RegMSE:
    """Mirror of the PyTorch module's interface (no parameters)."""

    def __call__(self, fix: dict, mov: dict, reg: dict, deform_space):
        return reg_mse_loss(reg["img"], fix["img"])


if __name__ == "__main__":
    key = jax.random.PRNGKey(0)
    k1, k2, k3, k4, k5, k6 = jax.random.split(key, 6)

    # NCHW, small shapes: batch=2, channels=4, spatial=16x16
    fix_img = jax.random.normal(k1, (2, 4, 16, 16), dtype=jnp.float32)
    reg_img = jax.random.normal(k2, (2, 4, 16, 16), dtype=jnp.float32)

    fix = {"img": fix_img}
    mov = {"img": fix_img}   # unused by forward, present for API parity
    reg = {"img": reg_img}
    deform_space = jnp.zeros((2, 3, 16, 16), dtype=jnp.float32)  # unused

    loss = RegMSE()(fix, mov, reg, deform_space)
    jax.block_until_ready(loss)
    ref = jnp.mean((reg_img - fix_img) ** 2)
    assert jnp.allclose(loss, ref, rtol=1e-6, atol=1e-6), (loss, ref)

    # Multi-tile + gated last-tile mask + ragged (<128-elem) tail path.
    x = jax.random.normal(k3, (3, 5, 40, 40), dtype=jnp.float32)
    y = jax.random.normal(k4, (3, 5, 40, 40), dtype=jnp.float32)
    loss2 = reg_mse_loss(x, y)
    jax.block_until_ready(loss2)
    ref2 = jnp.mean((x - y) ** 2)
    assert jnp.allclose(loss2, ref2, rtol=1e-5, atol=1e-6), (loss2, ref2)

    # Tiny-input fallback path (no kernel).
    u = jax.random.normal(k5, (1, 3, 7, 11), dtype=jnp.float32)
    v = jax.random.normal(k6, (1, 3, 7, 11), dtype=jnp.float32)
    loss3 = reg_mse_loss(u, v)
    jax.block_until_ready(loss3)
    ref3 = jnp.mean((u - v) ** 2)
    assert jnp.allclose(loss3, ref3, rtol=1e-6, atol=1e-6), (loss3, ref3)

    print("KERNEL_OK")
</pallas_src>

<mosaic_0001>
module attributes {stable_mosaic.version = 11 : i64} {
  func.func @kernel(%arg0: i32, %arg1: i32, %arg2: memref<16x128xf32, #tpu.memory_space<vmem>>, %arg3: memref<16x128xf32, #tpu.memory_space<vmem>>, %arg4: memref<1x16x128xf32, #tpu.memory_space<vmem>>) attributes {dimension_semantics = [#tpu.dimension_semantics<parallel>, #tpu.dimension_semantics<arbitrary>], iteration_bounds = array<i64: 1, 1>, scalar_prefetch = 0 : i64, scratch_operands = 0 : i64, tpu.core_type = #tpu.core_type<tc>, window_params = [{transform_indices = @transform_0, window_bounds = array<i64: 16, 128>}, {transform_indices = @transform_1, window_bounds = array<i64: 16, 128>}, {transform_indices = @transform_2, window_bounds = array<i64: 1, 16, 128>}]} {
    %c0_i32 = arith.constant 0 : i32
    %0 = arith.cmpi eq, %arg1, %c0_i32 : i32
    %1 = arith.extui %0 : i1 to i32
    %c0_i32_0 = arith.constant 0 : i32
    %2 = arith.cmpi ne, %1, %c0_i32_0 : i32
    scf.if %2 {
      %cst_10 = arith.constant 0.000000e+00 : f32
      %13 = vector.broadcast %cst_10 : f32 to vector<1x16x128xf32>
      %c0_11 = arith.constant 0 : index
      %c0_12 = arith.constant 0 : index
      %c0_13 = arith.constant 0 : index
      %14 = vector.load %arg4[%c0_11, %c0_12, %c0_13] : memref<1x16x128xf32, #tpu.memory_space<vmem>>, vector<1x16x128xf32>
      tpu.vector_store %arg4[%c0_11, %c0_12, %c0_13], %13 {strides = array<i32>} : memref<1x16x128xf32, #tpu.memory_space<vmem>>, vector<1x16x128xf32>,
    } else {
    }
    %c0 = arith.constant 0 : index
    %c0_1 = arith.constant 0 : index
    %3 = vector.load %arg2[%c0, %c0_1] : memref<16x128xf32, #tpu.memory_space<vmem>>, vector<16x128xf32>
    %c0_2 = arith.constant 0 : index
    %c0_3 = arith.constant 0 : index
    %4 = vector.load %arg3[%c0_2, %c0_3] : memref<16x128xf32, #tpu.memory_space<vmem>>, vector<16x128xf32>
    %5 = arith.subf %3, %4 : vector<16x128xf32>
    %6 = arith.mulf %5, %5 : vector<16x128xf32>
    %7 = vector.shape_cast %6 : vector<16x128xf32> to vector<1x16x128xf32>
    %cst = arith.constant dense<0.000000e+00> : vector<16x128xf32>
    %8 = vector.multi_reduction <add>, %7, %cst [0] : vector<1x16x128xf32> to vector<16x128xf32>
    %c0_4 = arith.constant 0 : index
    %c0_5 = arith.constant 0 : index
    %c0_6 = arith.constant 0 : index
    %9 = vector.load %arg4[%c0_4, %c0_5, %c0_6] : memref<1x16x128xf32, #tpu.memory_space<vmem>>, vector<1x16x128xf32>
    %10 = vector.shape_cast %8 : vector<16x128xf32> to vector<1x16x128xf32>
    %11 = arith.addf %9, %10 : vector<1x16x128xf32>
    %c0_7 = arith.constant 0 : index
    %c0_8 = arith.constant 0 : index
    %c0_9 = arith.constant 0 : index
    %12 = vector.load %arg4[%c0_7, %c0_8, %c0_9] : memref<1x16x128xf32, #tpu.memory_space<vmem>>, vector<1x16x128xf32>
    tpu.vector_store %arg4[%c0_7, %c0_8, %c0_9], %11 {strides = array<i32>} : memref<1x16x128xf32, #tpu.memory_space<vmem>>, vector<1x16x128xf32>,
    return
  }
  func.func @transform_0(%arg0: i32, %arg1: i32) -> (i32, i32) {
    %c1_i32 = arith.constant 1 : i32
    %0 = arith.muli %arg0, %c1_i32 : i32
    %1 = arith.addi %0, %arg1 : i32
    %c0_i32 = arith.constant 0 : i32
    %c0_i32_0 = arith.constant 0 : i32
    return %1, %c0_i32 : i32, i32
  }
  func.func @transform_1(%arg0: i32, %arg1: i32) -> (i32, i32) {
    %c1_i32 = arith.constant 1 : i32
    %0 = arith.muli %arg0, %c1_i32 : i32
    %1 = arith.addi %0, %arg1 : i32
    %c0_i32 = arith.constant 0 : i32
    %c0_i32_0 = arith.constant 0 : i32
    return %1, %c0_i32 : i32, i32
  }
  func.func @transform_2(%arg0: i32, %arg1: i32) -> (i32, i32, i32) {
    %c0_i32 = arith.constant 0 : i32
    %c0_i32_0 = arith.constant 0 : i32
    %c0_i32_1 = arith.constant 0 : i32
    return %arg0, %c0_i32, %c0_i32_0 : i32, i32, i32
  }
}

</mosaic_0001>

<llo_original>
// kernel: tpu_custom_call.1
$region0: #{tpu_custom_call.1}
  #allocation0 [shape = 'u32[]', space=smem, size = 0x4, offset = 0x4, fixed_abs, tag = 'smem constant byte address 0x4 - core index']
  #allocation1 [shape = 'u32[144,128]{1,0:T(1,128)}', space=vmem, size = 0x12000, scoped, tag = 'internal scratch']
  %s0 = inlined_call_operand.hbm [shape: f32[16,128], index: 0, kind: input, shape index: {}]
  %s1 = inlined_call_operand.hbm [shape: f32[16,128], index: 1, kind: input, shape index: {}]
  %s2 = inlined_call_operand.hbm [shape: f32[1,16,128], index: 2, kind: output, shape index: {}]
  %s3 = sld [smem:[#allocation0]]
  $region30: #{tpu_custom_call.1} parent=0
    _
  %s5 = ssub.s32 1, %s3
  %s6 = scalar_select 0, %s5, %s3
  $region1: #{tpu_custom_call.1} parent=0
    #allocation2 [shape = 'u8[8192]{0}', space=vmem, size = 0x2000, scoped, tag = 'input window, operand 0, single buffered']
    #allocation3 [shape = 's32[1]{0}', space=sflag, size = 0x4, scoped, tag = 'scoped memory for tpu_custom_call.1']
    #allocation4 [shape = 's32[1]{0}', space=sflag, size = 0x4, scoped, tag = 'scoped memory for tpu_custom_call.1']
    #allocation5 [shape = 'u8[8192]{0}', space=vmem, size = 0x2000, scoped, tag = 'input window, operand 1, single buffered']
    #allocation6 [shape = 's32[1]{0}', space=sflag, size = 0x4, scoped, tag = 'scoped memory for tpu_custom_call.1']
    #allocation7 [shape = 'u8[8192]{0}', space=vmem, size = 0x2000, scoped, tag = 'output window, operand 0, single buffered']
    %7 = vsyncpa [#allocation3], 0
    %8 = vsyncpa [#allocation6], 0
    %9 = vsyncpa [#allocation4], 0
    // Predicated region
    $region2: #{tpu_custom_call.1} parent=1 // pred_check
      _
    $region3: #{tpu_custom_call.1} parent=1 // pred_check_branch
      %11 = sbr.rel (0) target = $region5
    $region4: #{tpu_custom_call.1} parent=1 // pred_region
      %s12 = sadd.s32 0, 0
      %s13 = smul.u32 2, %s12
      %s15 = ssub.s32 256, 256
      %16 = vsyncadd [#allocation3], %s15
      %s17 = smul.addr %s13, 128
      %s18 = scalar_lea.hbm %s0, %s17
      %s19 = sshll.u32 [#allocation2], 4
      %s20 = int_to_ptr.vmem [resolvable:$true] %s19
      %25 = dma.hbm_to_vmem [thread:$0]  %s18, 256, %s20, [#allocation3], 128, 128, 8
    $region5: #{tpu_custom_call.1} parent=1 // pred_fallthru
      _
    // Predicated region
    $region6: #{tpu_custom_call.1} parent=1 // pred_check
      _
    $region7: #{tpu_custom_call.1} parent=1 // pred_check_branch
      %27 = sbr.rel (0) target = $region9
    $region8: #{tpu_custom_call.1} parent=1 // pred_region
      %s28 = sadd.s32 0, 0
      %s29 = smul.u32 2, %s28
      %s31 = ssub.s32 256, 256
      %32 = vsyncadd [#allocation6], %s31
      %s33 = smul.addr %s29, 128
      %s34 = scalar_lea.hbm %s1, %s33
      %s35 = sshll.u32 [#allocation5], 4
      %s36 = int_to_ptr.vmem [resolvable:$true] %s35
      %41 = dma.hbm_to_vmem [thread:$0]  %s34, 256, %s36, [#allocation6], 128, 128, 8
    $region9: #{tpu_custom_call.1} parent=1 // pred_fallthru
      _
    // Predicated region
    $region10: #{tpu_custom_call.1} parent=1 // pred_check
      _
    $region11: #{tpu_custom_call.1} parent=1 // pred_check_branch
      %43 = sbr.rel (0) target = $region13
    $region12: #{tpu_custom_call.1} parent=1 // pred_region
      %44 = dma.done [#allocation3], 256
    $region13: #{tpu_custom_call.1} parent=1 // pred_fallthru
      _
    // Predicated region
    $region14: #{tpu_custom_call.1} parent=1 // pred_check
      _
    $region15: #{tpu_custom_call.1} parent=1 // pred_check_branch
      %46 = sbr.rel (0) target = $region17
    $region16: #{tpu_custom_call.1} parent=1 // pred_region
      %47 = dma.done [#allocation6], 256
    $region17: #{tpu_custom_call.1} parent=1 // pred_fallthru
      _
    %s48 = sadd.s32 0, 0
    %s49 = smul.u32 2, %s48
    %s50 = sadd.s32 0, 0
    %s51 = smul.u32 2, %s50
    %p52 = scmp.eq.s32.totalorder 0, 0
    // Predicated region
    $region18: #{tpu_custom_call.1} parent=1 // pred_check
      %p53 = pneg %p52
    $region19: #{tpu_custom_call.1} parent=1 // pred_check_branch
      %55 = sbr.rel (%p53) target = $region21
    $region20: #{tpu_custom_call.1} parent=1 // pred_region
      %56 = vst [vmem:[#allocation7] sm:$0xff] 0.0
      %57 = vst [vmem:[#allocation7 + $0x8] sm:$0xff] 0.0
    $region21: #{tpu_custom_call.1} parent=1 // pred_fallthru
      _
    %v58 = vld [vmem:[#allocation2] sm:$0xff]
    %v59 = vld [vmem:[#allocation2 + $0x8] sm:$0xff]
    %v60 = vld [vmem:[#allocation5] sm:$0xff]
    %v61 = vld [vmem:[#allocation5 + $0x8] sm:$0xff]
    %v62 = vsub.f32 %v58, %v60
    %v63 = vsub.f32 %v59, %v61
    %v64 = vmul.f32 %v62, %v62
    %v65 = vmul.f32 %v63, %v63
    %v66 = vadd.f32 %v64, 0.0
    %v67 = vadd.f32 %v65, 0.0
    %v68 = vld [vmem:[#allocation7] sm:$0xff]
    %v69 = vld [vmem:[#allocation7 + $0x8] sm:$0xff]
    %v70 = vadd.f32 %v68, %v66
    %v71 = vadd.f32 %v69, %v67
    %72 = vst [vmem:[#allocation7] sm:$0xff] %v70
    %73 = vst [vmem:[#allocation7 + $0x8] sm:$0xff] %v71
    // Predicated region
    $region22: #{tpu_custom_call.1} parent=1 // pred_check
      _
    $region23: #{tpu_custom_call.1} parent=1 // pred_check_branch
      %75 = sbr.rel (0) target = $region25
    $region24: #{tpu_custom_call.1} parent=1 // pred_region
      %s77 = ssub.s32 256, 256
      %78 = vsyncadd [#allocation4], %s77
      %s79 = sshll.u32 [#allocation7], 4
      %s80 = int_to_ptr.vmem [resolvable:$true] %s79
      %85 = dma.vmem_to_hbm [thread:$0]  %s80, 256, %s2, [#allocation4], 128, 128, 8
    $region25: #{tpu_custom_call.1} parent=1 // pred_fallthru
      _
    // Predicated region
    $region26: #{tpu_custom_call.1} parent=1 // pred_check
      _
    $region27: #{tpu_custom_call.1} parent=1 // pred_check_branch
      %87 = sbr.rel (0) target = $region29
    $region28: #{tpu_custom_call.1} parent=1 // pred_region
      %88 = dma.done [#allocation4], 256
    $region29: #{tpu_custom_call.1} parent=1 // pred_fallthru
      _
    %89 = vsyncpa [#allocation3], 1
    %90 = vsyncpa [#allocation6], 1
    %91 = vsyncpa [#allocation4], 1

</llo_original>
